<compile_context>
chip_gen: v5e
topology: v5e:2x2
jax: 0.10.0
libtpu: 0.0.40
codegen_flags: <defaults>
</compile_context>

<pallas_src>
import jax
import jax.numpy as jnp
from jax.experimental import pallas as pl
from jax.experimental.pallas import tpu as pltpu


# ----------------------------------------------------------------------------
# Kernels: straight vld/vst copies (no relayout, no concat).
# ----------------------------------------------------------------------------
def _split3_kernel(x0_ref, x1_ref, x2_ref, s0_ref, s1_ref, s2_ref):
    s0_ref[...] = x0_ref[...]
    s1_ref[...] = x1_ref[...]
    s2_ref[...] = x2_ref[...]


def _split3_fused_kernel(x_ref, s0_ref, s1_ref, s2_ref):
    # x_ref block is (TN, 3*L); static 128-aligned views are free.
    L = s0_ref.shape[-1]
    s0_ref[...] = x_ref[:, 0:L]
    s1_ref[...] = x_ref[:, L:2 * L]
    s2_ref[...] = x_ref[:, 2 * L:3 * L]


# ----------------------------------------------------------------------------
# Tiling helpers.
# ----------------------------------------------------------------------------
_SMALL_BYPASS_BYTES = 1 << 20  # ~1 MiB: below this, launch overhead dominates.


def _vmem_budget_bytes():
    """Scoped-VMEM budget: ~3/4 of physical VMEM, capped at 96 MiB.

    v5e/v6e (128 MiB physical) -> 96 MiB; v7x (64 MiB physical) -> 48 MiB.
    Falls back to the conservative 48 MiB if the query is unavailable.
    """
    try:
        cap = int(pltpu.get_tpu_info().vmem_capacity_bytes)
    except Exception:
        cap = 64 * 1024 * 1024
    return min((cap * 3) // 4, 96 * 1024 * 1024)


def _pick_lane_tile(L, cap):
    """Largest multiple-of-128 divisor of L that is <= cap (L is 128-aligned)."""
    start = min(cap, L)
    start -= start % 128
    for t in range(start, 0, -128):
        if L % t == 0:
            return t
    return 128  # unreachable: 128 divides L


def _pallas_split3(x2d, N, L):
    """x2d: (N, 3*L) -> three (N, L) channel copies via one HBM read + write."""
    dtype = x2d.dtype
    itemsize = jnp.dtype(dtype).itemsize

    budget = _vmem_budget_bytes()

    # Per grid step: 3 input tiles + 3 output tiles, each double-buffered by
    # BlockSpec pipelining -> 12 * tile_bytes resident.  Keep under ~half the
    # scoped budget for headroom.
    max_tile_elems = max(128, (budget // 2) // (12 * itemsize))

    # Batch tile: full batch if small, else 64 rows (multiple of 8).
    TN = N if N <= 64 else 64
    lane_cap = max(128, (max_tile_elems // TN) // 128 * 128)
    TL = _pick_lane_tile(L, lane_cap)

    batch_tiles = pl.cdiv(N, TN)
    lane_tiles = L // TL

    # v7x megacore: guarantee >= 2 parallel grid steps so both TensorCores
    # issue DMAs.  Prefer splitting the lane axis (stays lane-dense).
    if batch_tiles == 1 and lane_tiles == 1:
        if L >= 256:
            TL = _pick_lane_tile(L, max(128, (L // 2) // 128 * 128))
            lane_tiles = L // TL
        if lane_tiles == 1 and N >= 16:
            TN = max(8, (N // 2) // 8 * 8)
            batch_tiles = pl.cdiv(N, TN)

    out_shape = tuple(jax.ShapeDtypeStruct((N, L), dtype) for _ in range(3))

    if lane_tiles == 1:
        # Fused single-input variant: one (TN, 3*L) DMA per step replaces
        # three separate channel loads.
        grid = (batch_tiles,)
        in_specs = [pl.BlockSpec((TN, 3 * L), lambda n: (n, 0))]
        out_specs = tuple(
            pl.BlockSpec((TN, L), lambda n: (n, 0)) for _ in range(3)
        )
        kernel = _split3_fused_kernel
        operands = (x2d,)
    else:
        # Three input operands, each reading exactly one channel's columns
        # (together x is read exactly once).  Larger axis first in the grid.
        nl = lane_tiles
        if lane_tiles >= batch_tiles:
            grid = (lane_tiles, batch_tiles)
            in_specs = [
                pl.BlockSpec((TN, TL), lambda l, n, i=i, nl=nl: (n, i * nl + l))
                for i in range(3)
            ]
            out_specs = tuple(
                pl.BlockSpec((TN, TL), lambda l, n: (n, l)) for _ in range(3)
            )
        else:
            grid = (batch_tiles, lane_tiles)
            in_specs = [
                pl.BlockSpec((TN, TL), lambda n, l, i=i, nl=nl: (n, i * nl + l))
                for i in range(3)
            ]
            out_specs = tuple(
                pl.BlockSpec((TN, TL), lambda n, l: (n, l)) for _ in range(3)
            )
        kernel = _split3_kernel
        operands = (x2d, x2d, x2d)

    cparams = pltpu.CompilerParams(
        dimension_semantics=("parallel",) * len(grid),
        vmem_limit_bytes=budget,
    )

    return pl.pallas_call(
        kernel,
        out_shape=out_shape,
        grid=grid,
        in_specs=in_specs,
        out_specs=out_specs,
        compiler_params=cparams,
    )(*operands)


# ----------------------------------------------------------------------------
# Forward pass matching Model2.forward.
# ----------------------------------------------------------------------------
def model2_forward(x):
    """x: (N, 3, H, W) -> (cat, (s0, s1, s2)), matching Model2.forward."""
    N, C, H, W = x.shape
    assert C == 3, "torch.split(v1, [1, 1, 1], dim=1) requires exactly 3 channels"
    L = H * W

    # torch.cat(torch.split(x, [1,1,1], dim=1), dim=1) is bit-identical to x:
    # return x itself instead of re-writing a full-size copy.
    concatenated = x

    total_bytes = x.size * jnp.dtype(x.dtype).itemsize
    if (L % 128 != 0) or (total_bytes < _SMALL_BYPASS_BYTES):
        # Lane-unaligned spatial extent (W on the lane axis would waste 7/8 of
        # every vreg with masked loads/stores) or tiny input (fixed Pallas
        # launch/DMA-setup cost dominates): XLA's contiguous channel slices
        # are already at roofline here.
        splits = tuple(x[:, i:i + 1, :, :] for i in range(3))
        return concatenated, splits

    # Lane-dense fast path: flatten (C, H, W) -> 3*L (free reshape on NCHW).
    x2d = x.reshape(N, C * L)
    s0, s1, s2 = _pallas_split3(x2d, N, L)
    splits = tuple(s.reshape(N, 1, H, W) for s in (s0, s1, s2))
    return concatenated, splits


if __name__ == "__main__":
    key = jax.random.PRNGKey(0)

    # Input large enough (~1.5 MiB, H*W = 16384 lane-aligned) to exercise the
    # Pallas fast path (above the small-input bypass).
    x = jax.random.normal(key, (8, 3, 128, 128), jnp.float32)
    cat, splits = jax.block_until_ready(model2_forward(x))
    assert cat.shape == x.shape
    assert jnp.array_equal(cat, x)
    for i, s in enumerate(splits):
        assert s.shape == (8, 1, 128, 128)
        assert jnp.array_equal(s, x[:, i:i + 1])

    # Tiny input: takes the small-input bypass (pure jnp slices).
    x_small = jax.random.normal(jax.random.PRNGKey(1), (2, 3, 16, 16), jnp.float32)
    cat_s, splits_s = jax.block_until_ready(model2_forward(x_small))
    assert jnp.array_equal(cat_s, x_small)
    for i, s in enumerate(splits_s):
        assert s.shape == (2, 1, 16, 16)
        assert jnp.array_equal(s, x_small[:, i:i + 1])

    print("KERNEL_OK")
</pallas_src>

<mosaic_0001>
module attributes {stable_mosaic.version = 11 : i64} {
  func.func @_split3_kernel(%arg0: i32, %arg1: i32, %arg2: memref<8x8192xf32, #tpu.memory_space<vmem>>, %arg3: memref<8x8192xf32, #tpu.memory_space<vmem>>, %arg4: memref<8x8192xf32, #tpu.memory_space<vmem>>, %arg5: memref<8x8192xf32, #tpu.memory_space<vmem>>, %arg6: memref<8x8192xf32, #tpu.memory_space<vmem>>, %arg7: memref<8x8192xf32, #tpu.memory_space<vmem>>) attributes {dimension_semantics = [#tpu.dimension_semantics<parallel>, #tpu.dimension_semantics<parallel>], iteration_bounds = array<i64: 2, 1>, scalar_prefetch = 0 : i64, scratch_operands = 0 : i64, tpu.core_type = #tpu.core_type<tc>, window_params = [{transform_indices = @transform_0, window_bounds = array<i64: 8, 8192>}, {transform_indices = @transform_1, window_bounds = array<i64: 8, 8192>}, {transform_indices = @transform_2, window_bounds = array<i64: 8, 8192>}, {transform_indices = @transform_3, window_bounds = array<i64: 8, 8192>}, {transform_indices = @transform_4, window_bounds = array<i64: 8, 8192>}, {transform_indices = @transform_5, window_bounds = array<i64: 8, 8192>}]} {
    %c0 = arith.constant 0 : index
    %c0_0 = arith.constant 0 : index
    %0 = vector.load %arg2[%c0, %c0_0] : memref<8x8192xf32, #tpu.memory_space<vmem>>, vector<8x8192xf32>
    %c0_1 = arith.constant 0 : index
    %c0_2 = arith.constant 0 : index
    %1 = vector.load %arg5[%c0_1, %c0_2] : memref<8x8192xf32, #tpu.memory_space<vmem>>, vector<8x8192xf32>
    tpu.vector_store %arg5[%c0_1, %c0_2], %0 {strides = array<i32>} : memref<8x8192xf32, #tpu.memory_space<vmem>>, vector<8x8192xf32>,
    %c0_3 = arith.constant 0 : index
    %c0_4 = arith.constant 0 : index
    %2 = vector.load %arg3[%c0_3, %c0_4] : memref<8x8192xf32, #tpu.memory_space<vmem>>, vector<8x8192xf32>
    %c0_5 = arith.constant 0 : index
    %c0_6 = arith.constant 0 : index
    %3 = vector.load %arg6[%c0_5, %c0_6] : memref<8x8192xf32, #tpu.memory_space<vmem>>, vector<8x8192xf32>
    tpu.vector_store %arg6[%c0_5, %c0_6], %2 {strides = array<i32>} : memref<8x8192xf32, #tpu.memory_space<vmem>>, vector<8x8192xf32>,
    %c0_7 = arith.constant 0 : index
    %c0_8 = arith.constant 0 : index
    %4 = vector.load %arg4[%c0_7, %c0_8] : memref<8x8192xf32, #tpu.memory_space<vmem>>, vector<8x8192xf32>
    %c0_9 = arith.constant 0 : index
    %c0_10 = arith.constant 0 : index
    %5 = vector.load %arg7[%c0_9, %c0_10] : memref<8x8192xf32, #tpu.memory_space<vmem>>, vector<8x8192xf32>
    tpu.vector_store %arg7[%c0_9, %c0_10], %4 {strides = array<i32>} : memref<8x8192xf32, #tpu.memory_space<vmem>>, vector<8x8192xf32>,
    return
  }
  func.func @transform_0(%arg0: i32, %arg1: i32) -> (i32, i32) {
    %c0_i32 = arith.constant 0 : i32
    %0 = arith.addi %c0_i32, %arg0 : i32
    %c0_i32_0 = arith.constant 0 : i32
    return %arg1, %0 : i32, i32
  }
  func.func @transform_1(%arg0: i32, %arg1: i32) -> (i32, i32) {
    %c2_i32 = arith.constant 2 : i32
    %0 = arith.addi %c2_i32, %arg0 : i32
    %c0_i32 = arith.constant 0 : i32
    return %arg1, %0 : i32, i32
  }
  func.func @transform_2(%arg0: i32, %arg1: i32) -> (i32, i32) {
    %c4_i32 = arith.constant 4 : i32
    %0 = arith.addi %c4_i32, %arg0 : i32
    %c0_i32 = arith.constant 0 : i32
    return %arg1, %0 : i32, i32
  }
  func.func @transform_3(%arg0: i32, %arg1: i32) -> (i32, i32) {
    %c0_i32 = arith.constant 0 : i32
    return %arg1, %arg0 : i32, i32
  }
  func.func @transform_4(%arg0: i32, %arg1: i32) -> (i32, i32) {
    %c0_i32 = arith.constant 0 : i32
    return %arg1, %arg0 : i32, i32
  }
  func.func @transform_5(%arg0: i32, %arg1: i32) -> (i32, i32) {
    %c0_i32 = arith.constant 0 : i32
    return %arg1, %arg0 : i32, i32
  }
}

</mosaic_0001>

<llo_original>
// kernel: tpu_custom_call.1
$region0: #{tpu_custom_call.1}
  #allocation0 [shape = 'u32[]', space=smem, size = 0x4, offset = 0x4, fixed_abs, tag = 'smem constant byte address 0x4 - core index']
  #allocation1 [shape = 'u32[72,128]{1,0:T(1,128)}', space=vmem, size = 0x9000, scoped, tag = 'internal scratch']
  %s0 = inlined_call_operand.hbm [shape: f32[8,49152], index: 0, kind: input, shape index: {}]
  %s1 = inlined_call_operand.hbm [shape: f32[8,49152], index: 1, kind: input, shape index: {}]
  %s2 = inlined_call_operand.hbm [shape: f32[8,49152], index: 2, kind: input, shape index: {}]
  %s3 = inlined_call_operand.hbm [shape: f32[8,16384], index: 3, kind: output, shape index: {0}]
  %s4 = inlined_call_operand.hbm [shape: f32[8,16384], index: 4, kind: output, shape index: {1}]
  %s5 = inlined_call_operand.hbm [shape: f32[8,16384], index: 5, kind: output, shape index: {2}]
  %6 = xla_tuple %s3, %s4, %s5
  %s7 = sld [smem:[#allocation0]]
  $region73: #{tpu_custom_call.1} parent=0
    _
  %s9 = ssub.s32 1, %s7
  %s10 = scalar_select 0, %s9, %s7
  $region1: #{tpu_custom_call.1} parent=0
    #allocation2 [shape = 'u8[524288]{0}', space=vmem, size = 0x80000, scoped, tag = 'input window, operand 0']
    #allocation3 [shape = 's32[2]{0}', space=sflag, size = 0x8, scoped, tag = 'scoped memory for tpu_custom_call.1']
    #allocation4 [shape = 's32[2]{0}', space=sflag, size = 0x8, scoped, tag = 'scoped memory for tpu_custom_call.1']
    #allocation5 [shape = 'u8[524288]{0}', space=vmem, size = 0x80000, scoped, tag = 'input window, operand 1']
    #allocation6 [shape = 's32[2]{0}', space=sflag, size = 0x8, scoped, tag = 'scoped memory for tpu_custom_call.1']
    #allocation7 [shape = 'u8[524288]{0}', space=vmem, size = 0x80000, scoped, tag = 'input window, operand 2']
    #allocation8 [shape = 'u8[524288]{0}', space=vmem, size = 0x80000, scoped, tag = 'output window, operand 0']
    #allocation9 [shape = 'u8[524288]{0}', space=vmem, size = 0x80000, scoped, tag = 'output window, operand 1']
    #allocation10 [shape = 's32[2]{0}', space=sflag, size = 0x8, scoped, tag = 'scoped memory for tpu_custom_call.1']
    #allocation11 [shape = 'u8[524288]{0}', space=vmem, size = 0x80000, scoped, tag = 'output window, operand 2']
    %11 = vsyncpa [#allocation3], 0
    %s12 = scalar_lea.sflag [#allocation3], 1
    %13 = vsyncpa %s12, 0
    %14 = vsyncpa [#allocation6], 0
    %s15 = scalar_lea.sflag [#allocation6], 1
    %16 = vsyncpa %s15, 0
    %17 = vsyncpa [#allocation4], 0
    %s18 = scalar_lea.sflag [#allocation4], 1
    %19 = vsyncpa %s18, 0
    %20 = vsyncpa [#allocation10], 0
    %s21 = scalar_lea.sflag [#allocation10], 1
    %22 = vsyncpa %s21, 0
    loop: start=0, step=1, limit=4
    $region2: #{tpu_custom_call.1} parent=1 // loop_pre_header
      _
    $region3: #{tpu_custom_call.1} parent=1 // loop_header
      %s24 = sphi 0, %s28
      %p25 = scmp.ge.s32.totalorder %s24, 4
      %s31 = sphi 0, %s43
      %s32 = sphi 0, %s39
      %s33 = sphi 0, %s31
      %s34 = sphi 0, %s32
      %s35 = sphi 0, %s33
      %s36 = sphi 0, %s34
      %s48 = sphi 0, %s50
      %s51 = sphi 0, %s48
      %s52 = sphi 0, %s51
      %s68 = sphi 0, %s52
      %s78 = sphi 0, %s80
      %s81 = sphi 0, %s78
      %s82 = sphi 0, %s81
      %s98 = sphi 0, %s82
      %s108 = sphi 0, %s110
      %s111 = sphi 0, %s108
      %s112 = sphi 0, %s111
      %s128 = sphi 0, %s112
      %s136 = sphi 0, %s138
      %s139 = sphi 0, %s136
      %s140 = sphi 0, %s139
      %s156 = sphi 0, %s140
      %s164 = sphi 0, %s166
      %s167 = sphi 0, %s164
      %s168 = sphi 0, %s167
      %s184 = sphi 0, %s168
      %s192 = sphi 0, %s194
      %s195 = sphi 0, %s192
      %s196 = sphi 0, %s195
      %s212 = sphi 0, %s196
    $region4: #{tpu_custom_call.1} parent=1 // loop_header_branch
      %27 = sbr.rel (%p25) target = $region8
    $region5: #{tpu_custom_call.1} parent=1 // loop_body
      %s29 = ssub.s32 %s24, 1
      %s30 = ssub.s32 %s24, 2
      %s37 = sadd.s32 1, %s32
      %p38 = scmp.ge.s32.totalorder %s37, 1
      %s39 = scalar_select %p38, 0, %s37
      %s40 = sadd.s32 1, %s31
      %s41 = scalar_select %p38, %s40, %s31
      %p42 = scmp.ge.s32.totalorder %s41, 2
      %s43 = scalar_select %p42, 0, %s41
      %s44 = ssub.s32 %s32, %s39
      %s45 = ssub.s32 %s31, %s43
      %s46 = sor.u32 %s44, %s45
      %p47 = scmp.eq.s32.totalorder %s46, 0
      %s49 = sadd.s32 %s48, 1
      %s50 = scalar_select %p47, %s48, %s49
      %p53 = pneg %p47
      %p54 = scmp.eq.s32.totalorder %s24, 1
      %p55 = por %p53, %p54
      %p56 = scmp.ne.s32.totalorder %s48, %s51
      %p57 = scmp.eq.s32.totalorder %s24, 0
      %p58 = por %p56, %p57
      %p59 = scmp.ne.s32.totalorder %s48, %s51
      %p60 = scmp.eq.s32.totalorder %s29, 1
      %p61 = por %p59, %p60
      %p62 = scmp.ne.s32.totalorder %s51, %s52
      %p63 = scmp.eq.s32.totalorder %s29, 0
      %p64 = por %p62, %p63
      %p65 = scmp.ne.s32.totalorder %s51, %s52
      %p66 = scmp.eq.s32.totalorder %s30, 1
      %p67 = por %p65, %p66
      %p69 = scmp.ne.s32.totalorder %s52, %s68
      %p70 = scmp.eq.s32.totalorder %s30, 0
      %p71 = por %p69, %p70
      %s72 = sadd.s32 %s31, 2
      %s73 = sadd.s32 %s43, 2
      %s74 = ssub.s32 %s32, %s39
      %s75 = ssub.s32 %s72, %s73
      %s76 = sor.u32 %s74, %s75
      %p77 = scmp.eq.s32.totalorder %s76, 0
      %s79 = sadd.s32 %s78, 1
      %s80 = scalar_select %p77, %s78, %s79
      %p83 = pneg %p77
      %p84 = scmp.eq.s32.totalorder %s24, 1
      %p85 = por %p83, %p84
      %p86 = scmp.ne.s32.totalorder %s78, %s81
      %p87 = scmp.eq.s32.totalorder %s24, 0
      %p88 = por %p86, %p87
      %p89 = scmp.ne.s32.totalorder %s78, %s81
      %p90 = scmp.eq.s32.totalorder %s29, 1
      %p91 = por %p89, %p90
      %p92 = scmp.ne.s32.totalorder %s81, %s82
      %p93 = scmp.eq.s32.totalorder %s29, 0
      %p94 = por %p92, %p93
      %p95 = scmp.ne.s32.totalorder %s81, %s82
      %p96 = scmp.eq.s32.totalorder %s30, 1
      %p97 = por %p95, %p96
      %p99 = scmp.ne.s32.totalorder %s82, %s98
      %p100 = scmp.eq.s32.totalorder %s30, 0
      %p101 = por %p99, %p100
      %s102 = sadd.s32 %s31, 4
      %s103 = sadd.s32 %s43, 4
      %s104 = ssub.s32 %s32, %s39
      %s105 = ssub.s32 %s102, %s103
      %s106 = sor.u32 %s104, %s105
      %p107 = scmp.eq.s32.totalorder %s106, 0
      %s109 = sadd.s32 %s108, 1
      %s110 = scalar_select %p107, %s108, %s109
      %p113 = pneg %p107
      %p114 = scmp.eq.s32.totalorder %s24, 1
      %p115 = por %p113, %p114
      %p116 = scmp.ne.s32.totalorder %s108, %s111
      %p117 = scmp.eq.s32.totalorder %s24, 0
      %p118 = por %p116, %p117
      %p119 = scmp.ne.s32.totalorder %s108, %s111
      %p120 = scmp.eq.s32.totalorder %s29, 1
      %p121 = por %p119, %p120
      %p122 = scmp.ne.s32.totalorder %s111, %s112
      %p123 = scmp.eq.s32.totalorder %s29, 0
      %p124 = por %p122, %p123
      %p125 = scmp.ne.s32.totalorder %s111, %s112
      %p126 = scmp.eq.s32.totalorder %s30, 1
      %p127 = por %p125, %p126
      %p129 = scmp.ne.s32.totalorder %s112, %s128
      %p130 = scmp.eq.s32.totalorder %s30, 0
      %p131 = por %p129, %p130
      %s132 = ssub.s32 %s32, %s39
      %s133 = ssub.s32 %s31, %s43
      %s134 = sor.u32 %s132, %s133
      %p135 = scmp.eq.s32.totalorder %s134, 0
      %s137 = sadd.s32 %s136, 1
      %s138 = scalar_select %p135, %s136, %s137
      %p141 = pneg %p135
      %p142 = scmp.eq.s32.totalorder %s24, 1
      %p143 = por %p141, %p142
      %p144 = scmp.ne.s32.totalorder %s136, %s139
      %p145 = scmp.eq.s32.totalorder %s24, 0
      %p146 = por %p144, %p145
      %p147 = scmp.ne.s32.totalorder %s136, %s139
      %p148 = scmp.eq.s32.totalorder %s29, 1
      %p149 = por %p147, %p148
      %p150 = scmp.ne.s32.totalorder %s139, %s140
      %p151 = scmp.eq.s32.totalorder %s29, 0
      %p152 = por %p150, %p151
      %p153 = scmp.ne.s32.totalorder %s139, %s140
      %p154 = scmp.eq.s32.totalorder %s30, 1
      %p155 = por %p153, %p154
      %p157 = scmp.ne.s32.totalorder %s140, %s156
      %p158 = scmp.eq.s32.totalorder %s30, 0
      %p159 = por %p157, %p158
      %s160 = ssub.s32 %s32, %s39
      %s161 = ssub.s32 %s31, %s43
      %s162 = sor.u32 %s160, %s161
      %p163 = scmp.eq.s32.totalorder %s162, 0
      %s165 = sadd.s32 %s164, 1
      %s166 = scalar_select %p163, %s164, %s165
      %p169 = pneg %p163
      %p170 = scmp.eq.s32.totalorder %s24, 1
      %p171 = por %p169, %p170
      %p172 = scmp.ne.s32.totalorder %s164, %s167
      %p173 = scmp.eq.s32.totalorder %s24, 0
      %p174 = por %p172, %p173
      %p175 = scmp.ne.s32.totalorder %s164, %s167
      %p176 = scmp.eq.s32.totalorder %s29, 1
      %p177 = por %p175, %p176
      %p178 = scmp.ne.s32.totalorder %s167, %s168
      %p179 = scmp.eq.s32.totalorder %s29, 0
      %p180 = por %p178, %p179
      %p181 = scmp.ne.s32.totalorder %s167, %s168
      %p182 = scmp.eq.s32.totalorder %s30, 1
      %p183 = por %p181, %p182
      %p185 = scmp.ne.s32.totalorder %s168, %s184
      %p186 = scmp.eq.s32.totalorder %s30, 0
      %p187 = por %p185, %p186
      %s188 = ssub.s32 %s32, %s39
      %s189 = ssub.s32 %s31, %s43
      %s190 = sor.u32 %s188, %s189
      %p191 = scmp.eq.s32.totalorder %s190, 0
      %s193 = sadd.s32 %s192, 1
      %s194 = scalar_select %p191, %s192, %s193
      %p197 = pneg %p191
      %p198 = scmp.eq.s32.totalorder %s24, 1
      %p199 = por %p197, %p198
      %p200 = scmp.ne.s32.totalorder %s192, %s195
      %p201 = scmp.eq.s32.totalorder %s24, 0
      %p202 = por %p200, %p201
      %p203 = scmp.ne.s32.totalorder %s192, %s195
      %p204 = scmp.eq.s32.totalorder %s29, 1
      %p205 = por %p203, %p204
      %p206 = scmp.ne.s32.totalorder %s195, %s196
      %p207 = scmp.eq.s32.totalorder %s29, 0
      %p208 = por %p206, %p207
      %p209 = scmp.ne.s32.totalorder %s195, %s196
      %p210 = scmp.eq.s32.totalorder %s30, 1
      %p211 = por %p209, %p210
      %p213 = scmp.ne.s32.totalorder %s196, %s212
      %p214 = scmp.eq.s32.totalorder %s30, 0
      %p215 = por %p213, %p214
      %p216 = scmp.le.s32.totalorder 1, %s24
      %p217 = scmp.lt.s32.totalorder %s24, 3
      %p218 = pnand %p216, %p217
      %p219 = pneg %p218
      // Predicated region
      $region9: #{tpu_custom_call.1} parent=5 // pred_check
        _
      $region10: #{tpu_custom_call.1} parent=5 // pred_check_branch
        %221 = sbr.rel (%p218) target = $region12
      $region11: #{tpu_custom_call.1} parent=5 // pred_region
        %s222 = ssub.s32 %s24, 1
      $region12: #{tpu_custom_call.1} parent=5 // pred_fallthru
        _
      %p223 = scmp.lt.s32.totalorder %s24, 2
      // Predicated region
      $region13: #{tpu_custom_call.1} parent=5 // pred_check
        %p224 = pneg %p223
      $region14: #{tpu_custom_call.1} parent=5 // pred_check_branch
        %226 = sbr.rel (%p224) target = $region16
      $region15: #{tpu_custom_call.1} parent=5 // pred_region
        // Predicated region
        $region17: #{tpu_custom_call.1} parent=15 // pred_check
          %p227 = pneg %p58
        $region18: #{tpu_custom_call.1} parent=15 // pred_check_branch
          %229 = sbr.rel (%p227) target = $region20
        $region19: #{tpu_custom_call.1} parent=15 // pred_region
          %s230 = sand.u32 %s48, 1
          %s231 = scalar_lea.sflag [#allocation3], %s230
          %s232 = sand.u32 %s48, 1
          %s233 = smul.addr %s232, 512
          %s234 = scalar_lea.vmem [#allocation2], %s233
          %s235 = smul.u32 64, %s31
          %237 = vsyncadd %s231, 0
          %s238 = smul.addr %s32, 384
          %s239 = sadd.s32 %s235, %s238
          %s240 = smul.addr %s239, 8
          %s241 = scalar_lea.hbm %s0, %s240
          %s243 = sshll.u32 %s241, 4
          %s244 = int_to_ptr.hbm [resolvable:$true] %s243
          %s245 = sshll.u32 %s234, 4
          %s246 = int_to_ptr.vmem [resolvable:$true] %s245
          %248 = dma.hbm_to_vmem [thread:$0]  %s244, 8192, %s246, %s231
        $region20: #{tpu_custom_call.1} parent=15 // pred_fallthru
          _
        // Predicated region
        $region21: #{tpu_custom_call.1} parent=15 // pred_check
          %p249 = pneg %p88
        $region22: #{tpu_custom_call.1} parent=15 // pred_check_branch
          %251 = sbr.rel (%p249) target = $region24
        $region23: #{tpu_custom_call.1} parent=15 // pred_region
          %s252 = sand.u32 %s24, 1
          %s253 = scalar_lea.sflag [#allocation6], %s252
          %s254 = sand.u32 %s78, 1
          %s255 = smul.addr %s254, 512
          %s256 = scalar_lea.vmem [#allocation5], %s255
          %s257 = sadd.s32 %s31, 2
          %s258 = smul.u32 64, %s257
          %260 = vsyncadd %s253, 0
          %s261 = smul.addr %s32, 384
          %s262 = sadd.s32 %s258, %s261
          %s263 = smul.addr %s262, 8
          %s264 = scalar_lea.hbm %s1, %s263
          %s266 = sshll.u32 %s264, 4
          %s267 = int_to_ptr.hbm [resolvable:$true] %s266
          %s268 = sshll.u32 %s256, 4
          %s269 = int_to_ptr.vmem [resolvable:$true] %s268
          %271 = dma.hbm_to_vmem [thread:$0]  %s267, 8192, %s269, %s253
        $region24: #{tpu_custom_call.1} parent=15 // pred_fallthru
          _
        // Predicated region
        $region25: #{tpu_custom_call.1} parent=15 // pred_check
          %p272 = pneg %p118
        $region26: #{tpu_custom_call.1} parent=15 // pred_check_branch
          %274 = sbr.rel (%p272) target = $region28
        $region27: #{tpu_custom_call.1} parent=15 // pred_region
          %s275 = sand.u32 %s24, 1
          %s276 = scalar_lea.sflag [#allocation6], %s275
          %s277 = sand.u32 %s108, 1
          %s278 = smul.addr %s277, 512
          %s279 = scalar_lea.vmem [#allocation7], %s278
          %s280 = sadd.s32 %s31, 4
          %s281 = smul.u32 64, %s280
          %283 = vsyncadd %s276, 0
          %s284 = smul.addr %s32, 384
          %s285 = sadd.s32 %s281, %s284
          %s286 = smul.addr %s285, 8
          %s287 = scalar_lea.hbm %s2, %s286
          %s289 = sshll.u32 %s287, 4
          %s290 = int_to_ptr.hbm [resolvable:$true] %s289
          %s291 = sshll.u32 %s279, 4
          %s292 = int_to_ptr.vmem [resolvable:$true] %s291
          %294 = dma.hbm_to_vmem [thread:$0]  %s290, 8192, %s292, %s276
        $region28: #{tpu_custom_call.1} parent=15 // pred_fallthru
          _
      $region16: #{tpu_custom_call.1} parent=5 // pred_fallthru
        _
      %p295 = scmp.le.s32.totalorder 1, %s24
      %p296 = scmp.lt.s32.totalorder %s24, 3
      %p297 = pnand %p295, %p296
      %p298 = pneg %p297
      // Predicated region
      $region29: #{tpu_custom_call.1} parent=5 // pred_check
        _
      $region30: #{tpu_custom_call.1} parent=5 // pred_check_branch
        %300 = sbr.rel (%p297) target = $region32
      $region31: #{tpu_custom_call.1} parent=5 // pred_region
        %s301 = ssub.s32 %s24, 1
        %s302 = sand.u32 %s51, 1
        %s303 = scalar_lea.sflag [#allocation3], %s302
        %s304 = sand.u32 %s51, 1
        %s305 = smul.addr %s304, 512
        %s306 = scalar_lea.vmem [#allocation2], %s305
        // Predicated region
        $region33: #{tpu_custom_call.1} parent=31 // pred_check
          %p307 = pneg %p64
        $region34: #{tpu_custom_call.1} parent=31 // pred_check_branch
          %309 = sbr.rel (%p307) target = $region36
        $region35: #{tpu_custom_call.1} parent=31 // pred_region
          %311 = dma.done %s303, 8192
        $region36: #{tpu_custom_call.1} parent=31 // pred_fallthru
          _
        %s312 = sand.u32 %s29, 1
        %s313 = scalar_lea.sflag [#allocation6], %s312
        %s314 = sand.u32 %s81, 1
        %s315 = smul.addr %s314, 512
        %s316 = scalar_lea.vmem [#allocation5], %s315
        // Predicated region
        $region37: #{tpu_custom_call.1} parent=31 // pred_check
          %p317 = pneg %p94
        $region38: #{tpu_custom_call.1} parent=31 // pred_check_branch
          %319 = sbr.rel (%p317) target = $region40
        $region39: #{tpu_custom_call.1} parent=31 // pred_region
          %321 = dma.done %s313, 8192
        $region40: #{tpu_custom_call.1} parent=31 // pred_fallthru
          _
        %s322 = sand.u32 %s29, 1
        %s323 = scalar_lea.sflag [#allocation6], %s322
        %s324 = sand.u32 %s111, 1
        %s325 = smul.addr %s324, 512
        %s326 = scalar_lea.vmem [#allocation7], %s325
        // Predicated region
        $region41: #{tpu_custom_call.1} parent=31 // pred_check
          %p327 = pneg %p124
        $region42: #{tpu_custom_call.1} parent=31 // pred_check_branch
          %329 = sbr.rel (%p327) target = $region44
        $region43: #{tpu_custom_call.1} parent=31 // pred_region
          %331 = dma.done %s323, 8192
        $region44: #{tpu_custom_call.1} parent=31 // pred_fallthru
          _
        %s332 = sand.u32 %s51, 1
        %s333 = scalar_lea.sflag [#allocation3], %s332
        %s334 = sand.u32 %s51, 1
        %s335 = smul.addr %s334, 512
        %s336 = scalar_lea.vmem [#allocation2], %s335
        %p337 = pneg %p64
        %p338 = pneg %p61
        %s339 = sand.u32 %s29, 1
        %s340 = scalar_lea.sflag [#allocation6], %s339
        %s341 = sand.u32 %s81, 1
        %s342 = smul.addr %s341, 512
        %s343 = scalar_lea.vmem [#allocation5], %s342
        %p344 = pneg %p94
        %p345 = pneg %p91
        %s346 = sand.u32 %s29, 1
        %s347 = scalar_lea.sflag [#allocation6], %s346
        %s348 = sand.u32 %s111, 1
        %s349 = smul.addr %s348, 512
        %s350 = scalar_lea.vmem [#allocation7], %s349
        %p351 = pneg %p124
        %p352 = pneg %p121
        %p353 = pneg %p152
        %p354 = pneg %p149
        %s355 = sand.u32 %s139, 1
        %s356 = scalar_lea.sflag [#allocation4], %s355
        %s357 = sand.u32 %s139, 1
        %s358 = smul.addr %s357, 512
        %s359 = scalar_lea.vmem [#allocation8], %s358
        %p360 = pneg %p180
        %p361 = pneg %p177
        %s362 = sand.u32 %s29, 1
        %s363 = scalar_lea.sflag [#allocation10], %s362
        %s364 = sand.u32 %s167, 1
        %s365 = smul.addr %s364, 512
        %s366 = scalar_lea.vmem [#allocation9], %s365
        %p367 = pneg %p208
        %p368 = pneg %p205
        %s369 = sand.u32 %s29, 1
        %s370 = scalar_lea.sflag [#allocation10], %s369
        %s371 = sand.u32 %s195, 1
        %s372 = smul.addr %s371, 512
        %s373 = scalar_lea.vmem [#allocation11], %s372
        %s374 = smul.u32 64, %s33
        %s375 = sadd.s32 %s33, 2
        %s376 = smul.u32 64, %s375
        %s377 = sadd.s32 %s33, 4
        %s378 = smul.u32 64, %s377
        %s379 = smul.u32 64, %s33
        %s380 = smul.u32 64, %s33
        %s381 = smul.u32 64, %s33
        %v382 = vld [vmem:[%s306] sm:$0xff]
        %v383 = vld [vmem:[%s306 + $0x8] sm:$0xff]
        %v384 = vld [vmem:[%s306 + $0x10] sm:$0xff]
        %v385 = vld [vmem:[%s306 + $0x18] sm:$0xff]
        %v386 = vld [vmem:[%s306 + $0x20] sm:$0xff]
        %v387 = vld [vmem:[%s306 + $0x28] sm:$0xff]
        %v388 = vld [vmem:[%s306 + $0x30] sm:$0xff]
        %v389 = vld [vmem:[%s306 + $0x38] sm:$0xff]
        %v390 = vld [vmem:[%s306 + $0x40] sm:$0xff]
        %v391 = vld [vmem:[%s306 + $0x48] sm:$0xff]
        %v392 = vld [vmem:[%s306 + $0x50] sm:$0xff]
        %v393 = vld [vmem:[%s306 + $0x58] sm:$0xff]
        %v394 = vld [vmem:[%s306 + $0x60] sm:$0xff]
        %v395 = vld [vmem:[%s306 + $0x68] sm:$0xff]
        %v396 = vld [vmem:[%s306 + $0x70] sm:$0xff]
        %v397 = vld [vmem:[%s306 + $0x78] sm:$0xff]
        %v398 = vld [vmem:[%s306 + $0x80] sm:$0xff]
        %v399 = vld [vmem:[%s306 + $0x88] sm:$0xff]
        %v400 = vld [vmem:[%s306 + $0x90] sm:$0xff]
        %v401 = vld [vmem:[%s306 + $0x98] sm:$0xff]
        %v402 = vld [vmem:[%s306 + $0xa0] sm:$0xff]
        %v403 = vld [vmem:[%s306 + $0xa8] sm:$0xff]
        %v404 = vld [vmem:[%s306 + $0xb0] sm:$0xff]
        %v405 = vld [vmem:[%s306 + $0xb8] sm:$0xff]
        %v406 = vld [vmem:[%s306 + $0xc0] sm:$0xff]
        %v407 = vld [vmem:[%s306 + $0xc8] sm:$0xff]
        %v408 = vld [vmem:[%s306 + $0xd0] sm:$0xff]
        %v409 = vld [vmem:[%s306 + $0xd8] sm:$0xff]
        %v410 = vld [vmem:[%s306 + $0xe0] sm:$0xff]
        %v411 = vld [vmem:[%s306 + $0xe8] sm:$0xff]
        %v412 = vld [vmem:[%s306 + $0xf0] sm:$0xff]
        %v413 = vld [vmem:[%s306 + $0xf8] sm:$0xff]
        %v414 = vld [vmem:[%s306 + $0x100] sm:$0xff]
        %v415 = vld [vmem:[%s306 + $0x108] sm:$0xff]
        %v416 = vld [vmem:[%s306 + $0x110] sm:$0xff]
        %v417 = vld [vmem:[%s306 + $0x118] sm:$0xff]
        %v418 = vld [vmem:[%s306 + $0x120] sm:$0xff]
        %v419 = vld [vmem:[%s306 + $0x128] sm:$0xff]
        %v420 = vld [vmem:[%s306 + $0x130] sm:$0xff]
        %v421 = vld [vmem:[%s306 + $0x138] sm:$0xff]
        %v422 = vld [vmem:[%s306 + $0x140] sm:$0xff]
        %v423 = vld [vmem:[%s306 + $0x148] sm:$0xff]
        %v424 = vld [vmem:[%s306 + $0x150] sm:$0xff]
        %v425 = vld [vmem:[%s306 + $0x158] sm:$0xff]
        %v426 = vld [vmem:[%s306 + $0x160] sm:$0xff]
        %v427 = vld [vmem:[%s306 + $0x168] sm:$0xff]
        %v428 = vld [vmem:[%s306 + $0x170] sm:$0xff]
        %v429 = vld [vmem:[%s306 + $0x178] sm:$0xff]
        %v430 = vld [vmem:[%s306 + $0x180] sm:$0xff]
        %v431 = vld [vmem:[%s306 + $0x188] sm:$0xff]
        %v432 = vld [vmem:[%s306 + $0x190] sm:$0xff]
        %v433 = vld [vmem:[%s306 + $0x198] sm:$0xff]
        %v434 = vld [vmem:[%s306 + $0x1a0] sm:$0xff]
        %v435 = vld [vmem:[%s306 + $0x1a8] sm:$0xff]
        %v436 = vld [vmem:[%s306 + $0x1b0] sm:$0xff]
        %v437 = vld [vmem:[%s306 + $0x1b8] sm:$0xff]
        %v438 = vld [vmem:[%s306 + $0x1c0] sm:$0xff]
        %v439 = vld [vmem:[%s306 + $0x1c8] sm:$0xff]
        %v440 = vld [vmem:[%s306 + $0x1d0] sm:$0xff]
        %v441 = vld [vmem:[%s306 + $0x1d8] sm:$0xff]
        %v442 = vld [vmem:[%s306 + $0x1e0] sm:$0xff]
        %v443 = vld [vmem:[%s306 + $0x1e8] sm:$0xff]
        %v444 = vld [vmem:[%s306 + $0x1f0] sm:$0xff]
        %v445 = vld [vmem:[%s306 + $0x1f8] sm:$0xff]
        %446 = vst [vmem:[%s359] sm:$0xff] %v382
        %447 = vst [vmem:[%s359 + $0x8] sm:$0xff] %v383
        %448 = vst [vmem:[%s359 + $0x10] sm:$0xff] %v384
        %449 = vst [vmem:[%s359 + $0x18] sm:$0xff] %v385
        %450 = vst [vmem:[%s359 + $0x20] sm:$0xff] %v386
        %451 = vst [vmem:[%s359 + $0x28] sm:$0xff] %v387
        %452 = vst [vmem:[%s359 + $0x30] sm:$0xff] %v388
        %453 = vst [vmem:[%s359 + $0x38] sm:$0xff] %v389
        %454 = vst [vmem:[%s359 + $0x40] sm:$0xff] %v390
        %455 = vst [vmem:[%s359 + $0x48] sm:$0xff] %v391
        %456 = vst [vmem:[%s359 + $0x50] sm:$0xff] %v392
        %457 = vst [vmem:[%s359 + $0x58] sm:$0xff] %v393
        %458 = vst [vmem:[%s359 + $0x60] sm:$0xff] %v394
        %459 = vst [vmem:[%s359 + $0x68] sm:$0xff] %v395
        %460 = vst [vmem:[%s359 + $0x70] sm:$0xff] %v396
        %461 = vst [vmem:[%s359 + $0x78] sm:$0xff] %v397
        %462 = vst [vmem:[%s359 + $0x80] sm:$0xff] %v398
        %463 = vst [vmem:[%s359 + $0x88] sm:$0xff] %v399
        %464 = vst [vmem:[%s359 + $0x90] sm:$0xff] %v400
        %465 = vst [vmem:[%s359 + $0x98] sm:$0xff] %v401
        %466 = vst [vmem:[%s359 + $0xa0] sm:$0xff] %v402
        %467 = vst [vmem:[%s359 + $0xa8] sm:$0xff] %v403
        %468 = vst [vmem:[%s359 + $0xb0] sm:$0xff] %v404
        %469 = vst [vmem:[%s359 + $0xb8] sm:$0xff] %v405
        %470 = vst [vmem:[%s359 + $0xc0] sm:$0xff] %v406
        %471 = vst [vmem:[%s359 + $0xc8] sm:$0xff] %v407
        %472 = vst [vmem:[%s359 + $0xd0] sm:$0xff] %v408
        %473 = vst [vmem:[%s359 + $0xd8] sm:$0xff] %v409
        %474 = vst [vmem:[%s359 + $0xe0] sm:$0xff] %v410
        %475 = vst [vmem:[%s359 + $0xe8] sm:$0xff] %v411
        %476 = vst [vmem:[%s359 + $0xf0] sm:$0xff] %v412
        %477 = vst [vmem:[%s359 + $0xf8] sm:$0xff] %v413
        %478 = vst [vmem:[%s359 + $0x100] sm:$0xff] %v414
        %479 = vst [vmem:[%s359 + $0x108] sm:$0xff] %v415
        %480 = vst [vmem:[%s359 + $0x110] sm:$0xff] %v416
        %481 = vst [vmem:[%s359 + $0x118] sm:$0xff] %v417
        %482 = vst [vmem:[%s359 + $0x120] sm:$0xff] %v418
        %483 = vst [vmem:[%s359 + $0x128] sm:$0xff] %v419
        %484 = vst [vmem:[%s359 + $0x130] sm:$0xff] %v420
        %485 = vst [vmem:[%s359 + $0x138] sm:$0xff] %v421
        %486 = vst [vmem:[%s359 + $0x140] sm:$0xff] %v422
        %487 = vst [vmem:[%s359 + $0x148] sm:$0xff] %v423
        %488 = vst [vmem:[%s359 + $0x150] sm:$0xff] %v424
        %489 = vst [vmem:[%s359 + $0x158] sm:$0xff] %v425
        %490 = vst [vmem:[%s359 + $0x160] sm:$0xff] %v426
        %491 = vst [vmem:[%s359 + $0x168] sm:$0xff] %v427
        %492 = vst [vmem:[%s359 + $0x170] sm:$0xff] %v428
        %493 = vst [vmem:[%s359 + $0x178] sm:$0xff] %v429
        %494 = vst [vmem:[%s359 + $0x180] sm:$0xff] %v430
        %495 = vst [vmem:[%s359 + $0x188] sm:$0xff] %v431
        %496 = vst [vmem:[%s359 + $0x190] sm:$0xff] %v432
        %497 = vst [vmem:[%s359 + $0x198] sm:$0xff] %v433
        %498 = vst [vmem:[%s359 + $0x1a0] sm:$0xff] %v434
        %499 = vst [vmem:[%s359 + $0x1a8] sm:$0xff] %v435
        %500 = vst [vmem:[%s359 + $0x1b0] sm:$0xff] %v436
        %501 = vst [vmem:[%s359 + $0x1b8] sm:$0xff] %v437
        %502 = vst [vmem:[%s359 + $0x1c0] sm:$0xff] %v438
        %503 = vst [vmem:[%s359 + $0x1c8] sm:$0xff] %v439
        %504 = vst [vmem:[%s359 + $0x1d0] sm:$0xff] %v440
        %505 = vst [vmem:[%s359 + $0x1d8] sm:$0xff] %v441
        %506 = vst [vmem:[%s359 + $0x1e0] sm:$0xff] %v442
        %507 = vst [vmem:[%s359 + $0x1e8] sm:$0xff] %v443
        %508 = vst [vmem:[%s359 + $0x1f0] sm:$0xff] %v444
        %509 = vst [vmem:[%s359 + $0x1f8] sm:$0xff] %v445
        %v510 = vld [vmem:[%s316] sm:$0xff]
        %v511 = vld [vmem:[%s316 + $0x8] sm:$0xff]
        %v512 = vld [vmem:[%s316 + $0x10] sm:$0xff]
        %v513 = vld [vmem:[%s316 + $0x18] sm:$0xff]
        %v514 = vld [vmem:[%s316 + $0x20] sm:$0xff]
        %v515 = vld [vmem:[%s316 + $0x28] sm:$0xff]
        %v516 = vld [vmem:[%s316 + $0x30] sm:$0xff]
        %v517 = vld [vmem:[%s316 + $0x38] sm:$0xff]
        %v518 = vld [vmem:[%s316 + $0x40] sm:$0xff]
        %v519 = vld [vmem:[%s316 + $0x48] sm:$0xff]
        %v520 = vld [vmem:[%s316 + $0x50] sm:$0xff]
        %v521 = vld [vmem:[%s316 + $0x58] sm:$0xff]
        %v522 = vld [vmem:[%s316 + $0x60] sm:$0xff]
        %v523 = vld [vmem:[%s316 + $0x68] sm:$0xff]
        %v524 = vld [vmem:[%s316 + $0x70] sm:$0xff]
        %v525 = vld [vmem:[%s316 + $0x78] sm:$0xff]
        %v526 = vld [vmem:[%s316 + $0x80] sm:$0xff]
        %v527 = vld [vmem:[%s316 + $0x88] sm:$0xff]
        %v528 = vld [vmem:[%s316 + $0x90] sm:$0xff]
        %v529 = vld [vmem:[%s316 + $0x98] sm:$0xff]
        %v530 = vld [vmem:[%s316 + $0xa0] sm:$0xff]
        %v531 = vld [vmem:[%s316 + $0xa8] sm:$0xff]
        %v532 = vld [vmem:[%s316 + $0xb0] sm:$0xff]
        %v533 = vld [vmem:[%s316 + $0xb8] sm:$0xff]
        %v534 = vld [vmem:[%s316 + $0xc0] sm:$0xff]
        %v535 = vld [vmem:[%s316 + $0xc8] sm:$0xff]
        %v536 = vld [vmem:[%s316 + $0xd0] sm:$0xff]
        %v537 = vld [vmem:[%s316 + $0xd8] sm:$0xff]
        %v538 = vld [vmem:[%s316 + $0xe0] sm:$0xff]
        %v539 = vld [vmem:[%s316 + $0xe8] sm:$0xff]
        %v540 = vld [vmem:[%s316 + $0xf0] sm:$0xff]
        %v541 = vld [vmem:[%s316 + $0xf8] sm:$0xff]
        %v542 = vld [vmem:[%s316 + $0x100] sm:$0xff]
        %v543 = vld [vmem:[%s316 + $0x108] sm:$0xff]
        %v544 = vld [vmem:[%s316 + $0x110] sm:$0xff]
        %v545 = vld [vmem:[%s316 + $0x118] sm:$0xff]
        %v546 = vld [vmem:[%s316 + $0x120] sm:$0xff]
        %v547 = vld [vmem:[%s316 + $0x128] sm:$0xff]
        %v548 = vld [vmem:[%s316 + $0x130] sm:$0xff]
        %v549 = vld [vmem:[%s316 + $0x138] sm:$0xff]
        %v550 = vld [vmem:[%s316 + $0x140] sm:$0xff]
        %v551 = vld [vmem:[%s316 + $0x148] sm:$0xff]
        %v552 = vld [vmem:[%s316 + $0x150] sm:$0xff]
        %v553 = vld [vmem:[%s316 + $0x158] sm:$0xff]
        %v554 = vld [vmem:[%s316 + $0x160] sm:$0xff]
        %v555 = vld [vmem:[%s316 + $0x168] sm:$0xff]
        %v556 = vld [vmem:[%s316 + $0x170] sm:$0xff]
        %v557 = vld [vmem:[%s316 + $0x178] sm:$0xff]
        %v558 = vld [vmem:[%s316 + $0x180] sm:$0xff]
        %v559 = vld [vmem:[%s316 + $0x188] sm:$0xff]
        %v560 = vld [vmem:[%s316 + $0x190] sm:$0xff]
        %v561 = vld [vmem:[%s316 + $0x198] sm:$0xff]
        %v562 = vld [vmem:[%s316 + $0x1a0] sm:$0xff]
        %v563 = vld [vmem:[%s316 + $0x1a8] sm:$0xff]
        %v564 = vld [vmem:[%s316 + $0x1b0] sm:$0xff]
        %v565 = vld [vmem:[%s316 + $0x1b8] sm:$0xff]
        %v566 = vld [vmem:[%s316 + $0x1c0] sm:$0xff]
        %v567 = vld [vmem:[%s316 + $0x1c8] sm:$0xff]
        %v568 = vld [vmem:[%s316 + $0x1d0] sm:$0xff]
        %v569 = vld [vmem:[%s316 + $0x1d8] sm:$0xff]
        %v570 = vld [vmem:[%s316 + $0x1e0] sm:$0xff]
        %v571 = vld [vmem:[%s316 + $0x1e8] sm:$0xff]
        %v572 = vld [vmem:[%s316 + $0x1f0] sm:$0xff]
        %v573 = vld [vmem:[%s316 + $0x1f8] sm:$0xff]
        %574 = vst [vmem:[%s366] sm:$0xff] %v510
        %575 = vst [vmem:[%s366 + $0x8] sm:$0xff] %v511
        %576 = vst [vmem:[%s366 + $0x10] sm:$0xff] %v512
        %577 = vst [vmem:[%s366 + $0x18] sm:$0xff] %v513
        %578 = vst [vmem:[%s366 + $0x20] sm:$0xff] %v514
        %579 = vst [vmem:[%s366 + $0x28] sm:$0xff] %v515
        %580 = vst [vmem:[%s366 + $0x30] sm:$0xff] %v516
        %581 = vst [vmem:[%s366 + $0x38] sm:$0xff] %v517
        %582 = vst [vmem:[%s366 + $0x40] sm:$0xff] %v518
        %583 = vst [vmem:[%s366 + $0x48] sm:$0xff] %v519
        %584 = vst [vmem:[%s366 + $0x50] sm:$0xff] %v520
        %585 = vst [vmem:[%s366 + $0x58] sm:$0xff] %v521
        %586 = vst [vmem:[%s366 + $0x60] sm:$0xff] %v522
        %587 = vst [vmem:[%s366 + $0x68] sm:$0xff] %v523
        %588 = vst [vmem:[%s366 + $0x70] sm:$0xff] %v524
        %589 = vst [vmem:[%s366 + $0x78] sm:$0xff] %v525
        %590 = vst [vmem:[%s366 + $0x80] sm:$0xff] %v526
        %591 = vst [vmem:[%s366 + $0x88] sm:$0xff] %v527
        %592 = vst [vmem:[%s366 + $0x90] sm:$0xff] %v528
        %593 = vst [vmem:[%s366 + $0x98] sm:$0xff] %v529
        %594 = vst [vmem:[%s366 + $0xa0] sm:$0xff] %v530
        %595 = vst [vmem:[%s366 + $0xa8] sm:$0xff] %v531
        %596 = vst [vmem:[%s366 + $0xb0] sm:$0xff] %v532
        %597 = vst [vmem:[%s366 + $0xb8] sm:$0xff] %v533
        %598 = vst [vmem:[%s366 + $0xc0] sm:$0xff] %v534
        %599 = vst [vmem:[%s366 + $0xc8] sm:$0xff] %v535
        %600 = vst [vmem:[%s366 + $0xd0] sm:$0xff] %v536
        %601 = vst [vmem:[%s366 + $0xd8] sm:$0xff] %v537
        %602 = vst [vmem:[%s366 + $0xe0] sm:$0xff] %v538
        %603 = vst [vmem:[%s366 + $0xe8] sm:$0xff] %v539
        %604 = vst [vmem:[%s366 + $0xf0] sm:$0xff] %v540
        %605 = vst [vmem:[%s366 + $0xf8] sm:$0xff] %v541
        %606 = vst [vmem:[%s366 + $0x100] sm:$0xff] %v542
        %607 = vst [vmem:[%s366 + $0x108] sm:$0xff] %v543
        %608 = vst [vmem:[%s366 + $0x110] sm:$0xff] %v544
        %609 = vst [vmem:[%s366 + $0x118] sm:$0xff] %v545
        %610 = vst [vmem:[%s366 + $0x120] sm:$0xff] %v546
        %611 = vst [vmem:[%s366 + $0x128] sm:$0xff] %v547
        %612 = vst [vmem:[%s366 + $0x130] sm:$0xff] %v548
        %613 = vst [vmem:[%s366 + $0x138] sm:$0xff] %v549
        %614 = vst [vmem:[%s366 + $0x140] sm:$0xff] %v550
        %615 = vst [vmem:[%s366 + $0x148] sm:$0xff] %v551
        %616 = vst [vmem:[%s366 + $0x150] sm:$0xff] %v552
        %617 = vst [vmem:[%s366 + $0x158] sm:$0xff] %v553
        %618 = vst [vmem:[%s366 + $0x160] sm:$0xff] %v554
        %619 = vst [vmem:[%s366 + $0x168] sm:$0xff] %v555
        %620 = vst [vmem:[%s366 + $0x170] sm:$0xff] %v556
        %621 = vst [vmem:[%s366 + $0x178] sm:$0xff] %v557
        %622 = vst [vmem:[%s366 + $0x180] sm:$0xff] %v558
        %623 = vst [vmem:[%s366 + $0x188] sm:$0xff] %v559
        %624 = vst [vmem:[%s366 + $0x190] sm:$0xff] %v560
        %625 = vst [vmem:[%s366 + $0x198] sm:$0xff] %v561
        %626 = vst [vmem:[%s366 + $0x1a0] sm:$0xff] %v562
        %627 = vst [vmem:[%s366 + $0x1a8] sm:$0xff] %v563
        %628 = vst [vmem:[%s366 + $0x1b0] sm:$0xff] %v564
        %629 = vst [vmem:[%s366 + $0x1b8] sm:$0xff] %v565
        %630 = vst [vmem:[%s366 + $0x1c0] sm:$0xff] %v566
        %631 = vst [vmem:[%s366 + $0x1c8] sm:$0xff] %v567
        %632 = vst [vmem:[%s366 + $0x1d0] sm:$0xff] %v568
        %633 = vst [vmem:[%s366 + $0x1d8] sm:$0xff] %v569
        %634 = vst [vmem:[%s366 + $0x1e0] sm:$0xff] %v570
        %635 = vst [vmem:[%s366 + $0x1e8] sm:$0xff] %v571
        %636 = vst [vmem:[%s366 + $0x1f0] sm:$0xff] %v572
        %637 = vst [vmem:[%s366 + $0x1f8] sm:$0xff] %v573
        %v638 = vld [vmem:[%s326] sm:$0xff]
        %v639 = vld [vmem:[%s326 + $0x8] sm:$0xff]
        %v640 = vld [vmem:[%s326 + $0x10] sm:$0xff]
        %v641 = vld [vmem:[%s326 + $0x18] sm:$0xff]
        %v642 = vld [vmem:[%s326 + $0x20] sm:$0xff]
        %v643 = vld [vmem:[%s326 + $0x28] sm:$0xff]
        %v644 = vld [vmem:[%s326 + $0x30] sm:$0xff]
        %v645 = vld [vmem:[%s326 + $0x38] sm:$0xff]
        %v646 = vld [vmem:[%s326 + $0x40] sm:$0xff]
        %v647 = vld [vmem:[%s326 + $0x48] sm:$0xff]
        %v648 = vld [vmem:[%s326 + $0x50] sm:$0xff]
        %v649 = vld [vmem:[%s326 + $0x58] sm:$0xff]
        %v650 = vld [vmem:[%s326 + $0x60] sm:$0xff]
        %v651 = vld [vmem:[%s326 + $0x68] sm:$0xff]
        %v652 = vld [vmem:[%s326 + $0x70] sm:$0xff]
        %v653 = vld [vmem:[%s326 + $0x78] sm:$0xff]
        %v654 = vld [vmem:[%s326 + $0x80] sm:$0xff]
        %v655 = vld [vmem:[%s326 + $0x88] sm:$0xff]
        %v656 = vld [vmem:[%s326 + $0x90] sm:$0xff]
        %v657 = vld [vmem:[%s326 + $0x98] sm:$0xff]
        %v658 = vld [vmem:[%s326 + $0xa0] sm:$0xff]
        %v659 = vld [vmem:[%s326 + $0xa8] sm:$0xff]
        %v660 = vld [vmem:[%s326 + $0xb0] sm:$0xff]
        %v661 = vld [vmem:[%s326 + $0xb8] sm:$0xff]
        %v662 = vld [vmem:[%s326 + $0xc0] sm:$0xff]
        %v663 = vld [vmem:[%s326 + $0xc8] sm:$0xff]
        %v664 = vld [vmem:[%s326 + $0xd0] sm:$0xff]
        %v665 = vld [vmem:[%s326 + $0xd8] sm:$0xff]
        %v666 = vld [vmem:[%s326 + $0xe0] sm:$0xff]
        %v667 = vld [vmem:[%s326 + $0xe8] sm:$0xff]
        %v668 = vld [vmem:[%s326 + $0xf0] sm:$0xff]
        %v669 = vld [vmem:[%s326 + $0xf8] sm:$0xff]
        %v670 = vld [vmem:[%s326 + $0x100] sm:$0xff]
        %v671 = vld [vmem:[%s326 + $0x108] sm:$0xff]
        %v672 = vld [vmem:[%s326 + $0x110] sm:$0xff]
        %v673 = vld [vmem:[%s326 + $0x118] sm:$0xff]
        %v674 = vld [vmem:[%s326 + $0x120] sm:$0xff]
        %v675 = vld [vmem:[%s326 + $0x128] sm:$0xff]
        %v676 = vld [vmem:[%s326 + $0x130] sm:$0xff]
        %v677 = vld [vmem:[%s326 + $0x138] sm:$0xff]
        %v678 = vld [vmem:[%s326 + $0x140] sm:$0xff]
        %v679 = vld [vmem:[%s326 + $0x148] sm:$0xff]
        %v680 = vld [vmem:[%s326 + $0x150] sm:$0xff]
        %v681 = vld [vmem:[%s326 + $0x158] sm:$0xff]
        %v682 = vld [vmem:[%s326 + $0x160] sm:$0xff]
        %v683 = vld [vmem:[%s326 + $0x168] sm:$0xff]
        %v684 = vld [vmem:[%s326 + $0x170] sm:$0xff]
        %v685 = vld [vmem:[%s326 + $0x178] sm:$0xff]
        %v686 = vld [vmem:[%s326 + $0x180] sm:$0xff]
        %v687 = vld [vmem:[%s326 + $0x188] sm:$0xff]
        %v688 = vld [vmem:[%s326 + $0x190] sm:$0xff]
        %v689 = vld [vmem:[%s326 + $0x198] sm:$0xff]
        %v690 = vld [vmem:[%s326 + $0x1a0] sm:$0xff]
        %v691 = vld [vmem:[%s326 + $0x1a8] sm:$0xff]
        %v692 = vld [vmem:[%s326 + $0x1b0] sm:$0xff]
        %v693 = vld [vmem:[%s326 + $0x1b8] sm:$0xff]
        %v694 = vld [vmem:[%s326 + $0x1c0] sm:$0xff]
        %v695 = vld [vmem:[%s326 + $0x1c8] sm:$0xff]
        %v696 = vld [vmem:[%s326 + $0x1d0] sm:$0xff]
        %v697 = vld [vmem:[%s326 + $0x1d8] sm:$0xff]
        %v698 = vld [vmem:[%s326 + $0x1e0] sm:$0xff]
        %v699 = vld [vmem:[%s326 + $0x1e8] sm:$0xff]
        %v700 = vld [vmem:[%s326 + $0x1f0] sm:$0xff]
        %v701 = vld [vmem:[%s326 + $0x1f8] sm:$0xff]
        %702 = vst [vmem:[%s373] sm:$0xff] %v638
        %703 = vst [vmem:[%s373 + $0x8] sm:$0xff] %v639
        %704 = vst [vmem:[%s373 + $0x10] sm:$0xff] %v640
        %705 = vst [vmem:[%s373 + $0x18] sm:$0xff] %v641
        %706 = vst [vmem:[%s373 + $0x20] sm:$0xff] %v642
        %707 = vst [vmem:[%s373 + $0x28] sm:$0xff] %v643
        %708 = vst [vmem:[%s373 + $0x30] sm:$0xff] %v644
        %709 = vst [vmem:[%s373 + $0x38] sm:$0xff] %v645
        %710 = vst [vmem:[%s373 + $0x40] sm:$0xff] %v646
        %711 = vst [vmem:[%s373 + $0x48] sm:$0xff] %v647
        %712 = vst [vmem:[%s373 + $0x50] sm:$0xff] %v648
        %713 = vst [vmem:[%s373 + $0x58] sm:$0xff] %v649
        %714 = vst [vmem:[%s373 + $0x60] sm:$0xff] %v650
        %715 = vst [vmem:[%s373 + $0x68] sm:$0xff] %v651
        %716 = vst [vmem:[%s373 + $0x70] sm:$0xff] %v652
        %717 = vst [vmem:[%s373 + $0x78] sm:$0xff] %v653
        %718 = vst [vmem:[%s373 + $0x80] sm:$0xff] %v654
        %719 = vst [vmem:[%s373 + $0x88] sm:$0xff] %v655
        %720 = vst [vmem:[%s373 + $0x90] sm:$0xff] %v656
        %721 = vst [vmem:[%s373 + $0x98] sm:$0xff] %v657
        %722 = vst [vmem:[%s373 + $0xa0] sm:$0xff] %v658
        %723 = vst [vmem:[%s373 + $0xa8] sm:$0xff] %v659
        %724 = vst [vmem:[%s373 + $0xb0] sm:$0xff] %v660
        %725 = vst [vmem:[%s373 + $0xb8] sm:$0xff] %v661
        %726 = vst [vmem:[%s373 + $0xc0] sm:$0xff] %v662
        %727 = vst [vmem:[%s373 + $0xc8] sm:$0xff] %v663
        %728 = vst [vmem:[%s373 + $0xd0] sm:$0xff] %v664
        %729 = vst [vmem:[%s373 + $0xd8] sm:$0xff] %v665
        %730 = vst [vmem:[%s373 + $0xe0] sm:$0xff] %v666
        %731 = vst [vmem:[%s373 + $0xe8] sm:$0xff] %v667
        %732 = vst [vmem:[%s373 + $0xf0] sm:$0xff] %v668
        %733 = vst [vmem:[%s373 + $0xf8] sm:$0xff] %v669
        %734 = vst [vmem:[%s373 + $0x100] sm:$0xff] %v670
        %735 = vst [vmem:[%s373 + $0x108] sm:$0xff] %v671
        %736 = vst [vmem:[%s373 + $0x110] sm:$0xff] %v672
        %737 = vst [vmem:[%s373 + $0x118] sm:$0xff] %v673
        %738 = vst [vmem:[%s373 + $0x120] sm:$0xff] %v674
        %739 = vst [vmem:[%s373 + $0x128] sm:$0xff] %v675
        %740 = vst [vmem:[%s373 + $0x130] sm:$0xff] %v676
        %741 = vst [vmem:[%s373 + $0x138] sm:$0xff] %v677
        %742 = vst [vmem:[%s373 + $0x140] sm:$0xff] %v678
        %743 = vst [vmem:[%s373 + $0x148] sm:$0xff] %v679
        %744 = vst [vmem:[%s373 + $0x150] sm:$0xff] %v680
        %745 = vst [vmem:[%s373 + $0x158] sm:$0xff] %v681
        %746 = vst [vmem:[%s373 + $0x160] sm:$0xff] %v682
        %747 = vst [vmem:[%s373 + $0x168] sm:$0xff] %v683
        %748 = vst [vmem:[%s373 + $0x170] sm:$0xff] %v684
        %749 = vst [vmem:[%s373 + $0x178] sm:$0xff] %v685
        %750 = vst [vmem:[%s373 + $0x180] sm:$0xff] %v686
        %751 = vst [vmem:[%s373 + $0x188] sm:$0xff] %v687
        %752 = vst [vmem:[%s373 + $0x190] sm:$0xff] %v688
        %753 = vst [vmem:[%s373 + $0x198] sm:$0xff] %v689
        %754 = vst [vmem:[%s373 + $0x1a0] sm:$0xff] %v690
        %755 = vst [vmem:[%s373 + $0x1a8] sm:$0xff] %v691
        %756 = vst [vmem:[%s373 + $0x1b0] sm:$0xff] %v692
        %757 = vst [vmem:[%s373 + $0x1b8] sm:$0xff] %v693
        %758 = vst [vmem:[%s373 + $0x1c0] sm:$0xff] %v694
        %759 = vst [vmem:[%s373 + $0x1c8] sm:$0xff] %v695
        %760 = vst [vmem:[%s373 + $0x1d0] sm:$0xff] %v696
        %761 = vst [vmem:[%s373 + $0x1d8] sm:$0xff] %v697
        %762 = vst [vmem:[%s373 + $0x1e0] sm:$0xff] %v698
        %763 = vst [vmem:[%s373 + $0x1e8] sm:$0xff] %v699
        %764 = vst [vmem:[%s373 + $0x1f0] sm:$0xff] %v700
        %765 = vst [vmem:[%s373 + $0x1f8] sm:$0xff] %v701
        %s766 = sand.u32 %s139, 1
        %s767 = scalar_lea.sflag [#allocation4], %s766
        %s768 = sand.u32 %s139, 1
        %s769 = smul.addr %s768, 512
        %s770 = scalar_lea.vmem [#allocation8], %s769
        %s771 = sand.u32 %s29, 1
        %s772 = scalar_lea.sflag [#allocation10], %s771
        %s773 = sand.u32 %s167, 1
        %s774 = smul.addr %s773, 512
        %s775 = scalar_lea.vmem [#allocation9], %s774
        %s776 = sand.u32 %s29, 1
        %s777 = scalar_lea.sflag [#allocation10], %s776
        %s778 = sand.u32 %s195, 1
        %s779 = smul.addr %s778, 512
        %s780 = scalar_lea.vmem [#allocation11], %s779
        // Predicated region
        $region45: #{tpu_custom_call.1} parent=31 // pred_check
          %p781 = pneg %p149
        $region46: #{tpu_custom_call.1} parent=31 // pred_check_branch
          %783 = sbr.rel (%p781) target = $region48
        $region47: #{tpu_custom_call.1} parent=31 // pred_region
          %s784 = smul.u32 64, %s33
          %786 = vsyncadd %s767, 0
          %s787 = smul.addr %s34, 128
          %s788 = sadd.s32 %s784, %s787
          %s789 = smul.addr %s788, 8
          %s790 = scalar_lea.hbm %s3, %s789
          %s792 = sshll.u32 %s770, 4
          %s793 = int_to_ptr.vmem [resolvable:$true] %s792
          %s794 = sshll.u32 %s790, 4
          %s795 = int_to_ptr.hbm [resolvable:$true] %s794
          %797 = dma.vmem_to_hbm [thread:$0]  %s793, 8192, %s795, %s767
        $region48: #{tpu_custom_call.1} parent=31 // pred_fallthru
          _
        // Predicated region
        $region49: #{tpu_custom_call.1} parent=31 // pred_check
          %p798 = pneg %p177
        $region50: #{tpu_custom_call.1} parent=31 // pred_check_branch
          %800 = sbr.rel (%p798) target = $region52
        $region51: #{tpu_custom_call.1} parent=31 // pred_region
          %s801 = smul.u32 64, %s33
          %803 = vsyncadd %s772, 0
          %s804 = smul.addr %s34, 128
          %s805 = sadd.s32 %s801, %s804
          %s806 = smul.addr %s805, 8
          %s807 = scalar_lea.hbm %s4, %s806
          %s809 = sshll.u32 %s775, 4
          %s810 = int_to_ptr.vmem [resolvable:$true] %s809
          %s811 = sshll.u32 %s807, 4
          %s812 = int_to_ptr.hbm [resolvable:$true] %s811
          %814 = dma.vmem_to_hbm [thread:$0]  %s810, 8192, %s812, %s772
        $region52: #{tpu_custom_call.1} parent=31 // pred_fallthru
          _
        // Predicated region
        $region53: #{tpu_custom_call.1} parent=31 // pred_check
          %p815 = pneg %p205
        $region54: #{tpu_custom_call.1} parent=31 // pred_check_branch
          %817 = sbr.rel (%p815) target = $region56
        $region55: #{tpu_custom_call.1} parent=31 // pred_region
          %s818 = smul.u32 64, %s33
          %820 = vsyncadd %s777, 0
          %s821 = smul.addr %s34, 128
          %s822 = sadd.s32 %s818, %s821
          %s823 = smul.addr %s822, 8
          %s824 = scalar_lea.hbm %s5, %s823
          %s826 = sshll.u32 %s780, 4
          %s827 = int_to_ptr.vmem [resolvable:$true] %s826
          %s828 = sshll.u32 %s824, 4
          %s829 = int_to_ptr.hbm [resolvable:$true] %s828
          %831 = dma.vmem_to_hbm [thread:$0]  %s827, 8192, %s829, %s777
        $region56: #{tpu_custom_call.1} parent=31 // pred_fallthru
          _
      $region32: #{tpu_custom_call.1} parent=5 // pred_fallthru
        _
      %p832 = scmp.le.s32.totalorder 2, %s24
      // Predicated region
      $region57: #{tpu_custom_call.1} parent=5 // pred_check
        %p833 = pneg %p832
      $region58: #{tpu_custom_call.1} parent=5 // pred_check_branch
        %835 = sbr.rel (%p833) target = $region60
      $region59: #{tpu_custom_call.1} parent=5 // pred_region
        %s836 = ssub.s32 %s24, 2
        // Predicated region
        $region61: #{tpu_custom_call.1} parent=59 // pred_check
          %p837 = pneg %p155
        $region62: #{tpu_custom_call.1} parent=59 // pred_check_branch
          %839 = sbr.rel (%p837) target = $region64
        $region63: #{tpu_custom_call.1} parent=59 // pred_region
          %s840 = sand.u32 %s140, 1
          %s841 = scalar_lea.sflag [#allocation4], %s840
          %s842 = sand.u32 %s140, 1
          %s843 = smul.addr %s842, 512
          %s844 = scalar_lea.vmem [#allocation8], %s843
          %846 = dma.done %s841, 8192
        $region64: #{tpu_custom_call.1} parent=59 // pred_fallthru
          _
        // Predicated region
        $region65: #{tpu_custom_call.1} parent=59 // pred_check
          %p847 = pneg %p183
        $region66: #{tpu_custom_call.1} parent=59 // pred_check_branch
          %849 = sbr.rel (%p847) target = $region68
        $region67: #{tpu_custom_call.1} parent=59 // pred_region
          %s850 = sand.u32 %s30, 1
          %s851 = scalar_lea.sflag [#allocation10], %s850
          %s852 = sand.u32 %s168, 1
          %s853 = smul.addr %s852, 512
          %s854 = scalar_lea.vmem [#allocation9], %s853
          %856 = dma.done %s851, 8192
        $region68: #{tpu_custom_call.1} parent=59 // pred_fallthru
          _
        // Predicated region
        $region69: #{tpu_custom_call.1} parent=59 // pred_check
          %p857 = pneg %p211
        $region70: #{tpu_custom_call.1} parent=59 // pred_check_branch
          %859 = sbr.rel (%p857) target = $region72
        $region71: #{tpu_custom_call.1} parent=59 // pred_region
          %s860 = sand.u32 %s30, 1
          %s861 = scalar_lea.sflag [#allocation10], %s860
          %s862 = sand.u32 %s196, 1
          %s863 = smul.addr %s862, 512
          %s864 = scalar_lea.vmem [#allocation11], %s863
          %866 = dma.done %s861, 8192
        $region72: #{tpu_custom_call.1} parent=59 // pred_fallthru
          _
      $region60: #{tpu_custom_call.1} parent=5 // pred_fallthru
        _
    $region6: #{tpu_custom_call.1} parent=1 // loop_footer
      %s28 = sadd.s32 1, %s24
    $region7: #{tpu_custom_call.1} parent=1 // loop_footer_branch
      %23 = sbr.rel target = $region3
    $region8: #{tpu_custom_call.1} parent=1 // loop_exit
      _
    %867 = vsyncpa [#allocation3], 1
    %s868 = scalar_lea.sflag [#allocation3], 1
    %869 = vsyncpa %s868, 1
    %870 = vsyncpa [#allocation6], 1
    %s871 = scalar_lea.sflag [#allocation6], 1
    %872 = vsyncpa %s871, 1
    %873 = vsyncpa [#allocation4], 1
    %s874 = scalar_lea.sflag [#allocation4], 1
    %875 = vsyncpa %s874, 1
    %876 = vsyncpa [#allocation10], 1
    %s877 = scalar_lea.sflag [#allocation10], 1
    %878 = vsyncpa %s877, 1

</llo_original>
